<compile_context>
chip_gen: v6e
topology: v6e:2x2x1
jax: 0.10.0
libtpu: 0.0.40
codegen_flags: <defaults>
</compile_context>

<pallas_src>
import math

import jax
import jax.numpy as jnp
from jax.experimental import pallas as pl
from jax.experimental.pallas import tpu as pltpu


_GELU_C = math.sqrt(2.0 / math.pi)


def _new_gelu(x):
    # 0.5 * x * (1 + tanh(sqrt(2/pi) * (x + 0.044715 * x^3)))
    return 0.5 * x * (1.0 + jnp.tanh(_GELU_C * (x + 0.044715 * (x * x * x))))


def _round_up(a, b):
    return (a + b - 1) // b * b


def _vmem_capacity_bytes():
    try:
        cap = int(pltpu.get_tpu_info().vmem_capacity_bytes)
        if cap > 0:
            return cap
    except Exception:
        pass
    return 64 << 20  # conservative fallback (v7x per-TensorCore VMEM)


# ----------------------------------------------------------------------------- kernels
def _mlp_kernel_resident(x_ref, wfc_ref, bfc_ref, wproj_ref, bproj_ref, o_ref):
    # Full H resident in VMEM: single fused pass per row tile.
    # x_ref: (tm, C); wfc_ref: (C, H); wproj_ref: (H, C); biases (1, H)/(1, C).
    h = jnp.dot(x_ref[...], wfc_ref[...], preferred_element_type=jnp.float32)
    h = h + bfc_ref[...].astype(jnp.float32)
    g = _new_gelu(h)
    y = jnp.dot(g.astype(wproj_ref.dtype), wproj_ref[...],
                preferred_element_type=jnp.float32)
    y = y + bproj_ref[...].astype(jnp.float32)
    # TODO(synk): training-mode dropout (pltpu.prng_seed / prng_random_bits) not
    # implemented; identity (inference / eval) semantics are used.
    o_ref[...] = y.astype(o_ref.dtype)


def _mlp_kernel_htiled(x_ref, wfc_ref, bfc_ref, wproj_ref, bproj_ref, o_ref, acc_ref):
    # H = 4C tiled along grid axis 1 ("arbitrary"); f32 accumulator resident across it.
    j = pl.program_id(1)

    @pl.when(j == 0)
    def _init():
        acc_ref[...] = jnp.zeros_like(acc_ref)

    h = jnp.dot(x_ref[...], wfc_ref[...], preferred_element_type=jnp.float32)
    h = h + bfc_ref[...].astype(jnp.float32)
    g = _new_gelu(h)
    acc_ref[...] += jnp.dot(g.astype(wproj_ref.dtype), wproj_ref[...],
                            preferred_element_type=jnp.float32)

    @pl.when(j == pl.num_programs(1) - 1)
    def _finalize():
        y = acc_ref[...] + bproj_ref[...].astype(jnp.float32)
        # TODO(synk): training-mode dropout not implemented (identity / eval semantics).
        o_ref[...] = y.astype(o_ref.dtype)


# ----------------------------------------------------------------------------- wrapper
def mlp_forward(x, wfc_t, b_fc, wproj_t, b_proj, *, compute_dtype=jnp.bfloat16,
                tm=None, tn_h=None):
    """
    x       : (B, T, C)
    wfc_t   : (C, H)   c_fc weight, pre-transposed to (in, out)   [H = 4C]
    b_fc    : (H,)
    wproj_t : (H, C)   c_proj weight, pre-transposed to (in, out)
    b_proj  : (C,)
    returns : (B, T, C) in x's original dtype
    """
    B, T, C = x.shape
    C2, H = wfc_t.shape
    assert C2 == C and wproj_t.shape == (H, C)
    assert b_fc.shape == (H,) and b_proj.shape == (C,)

    out_dtype = x.dtype
    M = B * T

    # Mixed precision: bf16 operands, f32 accumulation (in-kernel).
    if compute_dtype is not None:
        if x.dtype != compute_dtype:
            x = x.astype(compute_dtype)
        wfc_t = wfc_t.astype(compute_dtype)
        wproj_t = wproj_t.astype(compute_dtype)

    bx = jnp.dtype(x.dtype).itemsize
    bw = jnp.dtype(wfc_t.dtype).itemsize
    sub = 8 if bx >= 4 else 16                      # sublane granularity

    cap = _vmem_capacity_bytes()
    usable = int(cap * 3 // 4)                      # leave headroom for compiler scratch

    # ---- row-tile candidates (prefer big tm; keep >=2 tiles when M allows, for megacore)
    max_tm = max(sub, min(512, _round_up(M, sub)))
    if M >= 2 * sub:
        max_tm = min(max_tm, _round_up((M + 1) // 2, sub))
    if tm is not None:
        tm_candidates = [max(sub, min(_round_up(tm, sub), _round_up(M, sub)))]
    else:
        base = (512, 384, 256, 192, 128, 64, 32, 16, 8)
        tm_candidates = [t for t in base if sub <= t <= max_tm]
        if max_tm not in tm_candidates:
            tm_candidates.insert(0, max_tm)

    # ---- VMEM-footprint estimates (conservative: assume double-buffering everywhere)
    def _resident_fit(t):
        return (2 * 2 * C * H * bw                  # wfc + wproj buffers
                + 4 * t * C * bx                    # x + out tiles (double-buffered)
                + 2 * (H + C) * 4                   # biases
                + t * H * (4 + bw)                  # h (f32) + g (compute dtype)
                + t * C * 4)                        # f32 result before downcast

    def _tiled_fit(t, tn):
        return (2 * 2 * C * tn * bw                 # wfc + wproj H-tiles (double-buffered)
                + 4 * t * C * bx
                + 2 * (tn + C) * 4
                + t * C * 4                         # f32 accumulator scratch
                + t * tn * (4 + bw))                # h (f32) + g (compute dtype)

    # ---- choose mode / tiles
    mode = None
    tm_eff = tn_eff = None
    need = 0

    if tn_h is None or tn_h >= H:
        # Weight-resident path: weights DMA'd once, stay in VMEM.
        for t in tm_candidates:
            n = _resident_fit(t)
            if n <= usable:
                mode, tm_eff, tn_eff, need = "resident", t, H, n
                break

    if mode is None:
        # H-tiled fallback; prefer larger tm (weight HBM traffic ~ 1/tm) over larger tn_h.
        if tn_h is not None and tn_h < H:
            assert H % tn_h == 0, "tn_h must divide H"
            tn_cands = [tn_h]
        else:
            tn_cands = [c for c in (2048, 1024, 512, 256, 128) if H % c == 0] or [H]
        picked = None
        for t in tm_candidates:
            for tn in tn_cands:
                n = _tiled_fit(t, tn)
                if n <= usable:
                    picked = (t, tn, n)
                    break
            if picked:
                break
        if picked is None:  # best effort: smallest tiles
            t, tn = tm_candidates[-1], tn_cands[-1]
            picked = (t, tn, _tiled_fit(t, tn))
        mode, tm_eff, tn_eff, need = "tiled", picked[0], picked[1], picked[2]

    # ---- pad token rows to the row tile
    M_pad = _round_up(M, tm_eff)
    x2d = x.reshape(M, C)
    if M_pad != M:
        x2d = jnp.pad(x2d, ((0, M_pad - M), (0, 0)))

    bfc_2d = b_fc.reshape(1, H)
    bproj_2d = b_proj.reshape(1, C)

    # ---- specs per mode
    if mode == "resident":
        grid = (M_pad // tm_eff,)
        in_specs = [
            pl.BlockSpec((tm_eff, C), lambda i: (i, 0)),   # x row tile
            pl.BlockSpec((C, H), lambda i: (0, 0)),        # W_fc^T (resident)
            pl.BlockSpec((1, H), lambda i: (0, 0)),        # b_fc
            pl.BlockSpec((H, C), lambda i: (0, 0)),        # W_proj^T (resident)
            pl.BlockSpec((1, C), lambda i: (0, 0)),        # b_proj
        ]
        out_specs = pl.BlockSpec((tm_eff, C), lambda i: (i, 0))
        scratch_shapes = []
        kernel = _mlp_kernel_resident
        dim_sem = ("parallel",)
        weight_fetches = 1
    else:
        grid = (M_pad // tm_eff, H // tn_eff)
        in_specs = [
            pl.BlockSpec((tm_eff, C), lambda i, j: (i, 0)),     # x row tile
            pl.BlockSpec((C, tn_eff), lambda i, j: (0, j)),     # W_fc^T H-tile
            pl.BlockSpec((1, tn_eff), lambda i, j: (0, j)),     # b_fc H-tile
            pl.BlockSpec((tn_eff, C), lambda i, j: (j, 0)),     # W_proj^T H-tile
            pl.BlockSpec((1, C), lambda i, j: (0, 0)),          # b_proj
        ]
        out_specs = pl.BlockSpec((tm_eff, C), lambda i, j: (i, 0))
        scratch_shapes = [pltpu.VMEM((tm_eff, C), jnp.float32)]
        kernel = _mlp_kernel_htiled
        dim_sem = ("parallel", "arbitrary")
        weight_fetches = M_pad // tm_eff

    # ---- scheduling hint: reflects the real weight re-fetch factor
    weight_bytes = (C * H + H * C) * bw
    cost = pl.CostEstimate(
        flops=4 * M_pad * C * H,                  # two matmuls, 2*M*C*H each
        transcendentals=M_pad * H,                # tanh
        bytes_accessed=(M_pad * C * bx
                        + weight_fetches * weight_bytes
                        + (H + C) * 4
                        + M_pad * C * jnp.dtype(out_dtype).itemsize),
    )

    # ---- always pass an explicit VMEM limit (v5e default scoped limit is only 16 MiB)
    vmem_limit = int(min(cap * 9 // 10, max(need * 5 // 4, 32 << 20)))

    out = pl.pallas_call(
        kernel,
        out_shape=jax.ShapeDtypeStruct((M_pad, C), out_dtype),
        grid_spec=pltpu.PrefetchScalarGridSpec(
            num_scalar_prefetch=0,
            grid=grid,
            in_specs=in_specs,
            out_specs=out_specs,
            scratch_shapes=scratch_shapes,
        ),
        compiler_params=pltpu.CompilerParams(
            dimension_semantics=dim_sem,
            vmem_limit_bytes=vmem_limit,
        ),
        cost_estimate=cost,
    )(x2d, wfc_t, bfc_2d, wproj_t, bproj_2d)

    if M_pad != M:
        out = out[:M]
    return out.reshape(B, T, C)


def _reference(x, w_fc, b_fc, w_proj, b_proj):
    # Pure-f32 reference matching the PyTorch module (weights in (out, in) layout).
    h = jnp.einsum("btc,hc->bth", x, w_fc) + b_fc
    g = _new_gelu(h)
    return jnp.einsum("bth,ch->btc", g, w_proj) + b_proj


if __name__ == "__main__":
    # Small config: n_embd=32, bias=True, dropout=0.0 (eval), batch=2, seq=8.
    B, T, C = 2, 8, 32
    H = 4 * C

    key = jax.random.PRNGKey(0)
    kx, k1, k2, k3, k4 = jax.random.split(key, 5)

    x = jax.random.normal(kx, (B, T, C), dtype=jnp.float32)
    # nn.Linear-style init magnitudes (PyTorch (out, in) layout).
    w_fc = jax.random.uniform(k1, (H, C), jnp.float32, -1.0, 1.0) / math.sqrt(C)
    b_fc = jax.random.uniform(k2, (H,), jnp.float32, -1.0, 1.0) / math.sqrt(C)
    w_proj = jax.random.uniform(k3, (C, H), jnp.float32, -1.0, 1.0) / math.sqrt(H)
    b_proj = jax.random.uniform(k4, (C,), jnp.float32, -1.0, 1.0) / math.sqrt(H)

    # Hoist the (out,in) -> (in,out) transposes out of the forward call (done once).
    wfc_t = jnp.transpose(w_fc)      # (C, H)
    wproj_t = jnp.transpose(w_proj)  # (H, C)

    fwd = jax.jit(mlp_forward)
    y = jax.block_until_ready(fwd(x, wfc_t, b_fc, wproj_t, b_proj))

    y_ref = _reference(x, w_fc, b_fc, w_proj, b_proj)
    assert y.shape == (B, T, C)
    assert y.dtype == x.dtype
    # bf16 operands / f32 accumulation vs. pure-f32 reference -> tolerance-based check.
    assert jnp.allclose(y, y_ref, atol=3e-2, rtol=3e-2), (
        "mismatch vs reference: max abs err = "
        f"{float(jnp.max(jnp.abs(y - y_ref))):.4e}")

    print("KERNEL_OK")
</pallas_src>

<mosaic_0001>
module attributes {stable_mosaic.version = 11 : i64} {
  func.func @_mlp_kernel_resident(%arg0: i32, %arg1: memref<16x32xbf16, #tpu.memory_space<vmem>>, %arg2: memref<32x128xbf16, #tpu.memory_space<vmem>>, %arg3: memref<1x128xf32, #tpu.memory_space<vmem>>, %arg4: memref<128x32xbf16, #tpu.memory_space<vmem>>, %arg5: memref<1x32xf32, #tpu.memory_space<vmem>>, %arg6: memref<16x32xf32, #tpu.memory_space<vmem>>) attributes {dimension_semantics = [#tpu.dimension_semantics<parallel>], iteration_bounds = array<i64: 1>, scalar_prefetch = 0 : i64, scratch_operands = 0 : i64, tpu.core_type = #tpu.core_type<tc>, window_params = [{transform_indices = @transform_0, window_bounds = array<i64: 16, 32>}, {pipeline_mode = #tpu.pipeline_mode<synchronous>, transform_indices = @transform_1, window_bounds = array<i64: 32, 128>}, {pipeline_mode = #tpu.pipeline_mode<synchronous>, transform_indices = @transform_2, window_bounds = array<i64: 1, 128>}, {pipeline_mode = #tpu.pipeline_mode<synchronous>, transform_indices = @transform_3, window_bounds = array<i64: 128, 32>}, {pipeline_mode = #tpu.pipeline_mode<synchronous>, transform_indices = @transform_4, window_bounds = array<i64: 1, 32>}, {transform_indices = @transform_5, window_bounds = array<i64: 16, 32>}]} {
    %c0 = arith.constant 0 : index
    %c0_0 = arith.constant 0 : index
    %0 = vector.load %arg1[%c0, %c0_0] : memref<16x32xbf16, #tpu.memory_space<vmem>>, vector<16x32xbf16>
    %c0_1 = arith.constant 0 : index
    %c0_2 = arith.constant 0 : index
    %1 = vector.load %arg2[%c0_1, %c0_2] : memref<32x128xbf16, #tpu.memory_space<vmem>>, vector<32x128xbf16>
    %cst = arith.constant dense<0.000000e+00> : vector<16x128xf32>
    %2 = tpu.matmul %0, %1, %cst {dimension_numbers = #tpu.dot_dimension_numbers<[1], [0], [0], [1], [0, 0, 1, 1], [], []>} : vector<16x32xbf16>, vector<32x128xbf16>, vector<16x128xf32> -> vector<16x128xf32>
    %c0_3 = arith.constant 0 : index
    %c0_4 = arith.constant 0 : index
    %3 = vector.load %arg3[%c0_3, %c0_4] : memref<1x128xf32, #tpu.memory_space<vmem>>, vector<1x128xf32>
    %4 = vector.broadcast %3 : vector<1x128xf32> to vector<16x128xf32>
    %5 = arith.addf %2, %4 : vector<16x128xf32>
    %cst_5 = arith.constant 5.000000e-01 : f32
    %6 = vector.broadcast %cst_5 : f32 to vector<16x128xf32>
    %7 = arith.mulf %6, %5 : vector<16x128xf32>
    %8 = arith.mulf %5, %5 : vector<16x128xf32>
    %9 = arith.mulf %8, %5 : vector<16x128xf32>
    %cst_6 = arith.constant 4.471500e-02 : f32
    %10 = vector.broadcast %cst_6 : f32 to vector<16x128xf32>
    %11 = arith.mulf %10, %9 : vector<16x128xf32>
    %12 = arith.addf %5, %11 : vector<16x128xf32>
    %cst_7 = arith.constant 0.797884583 : f32
    %13 = vector.broadcast %cst_7 : f32 to vector<16x128xf32>
    %14 = arith.mulf %13, %12 : vector<16x128xf32>
    %15 = math.tanh %14 : vector<16x128xf32>
    %cst_8 = arith.constant 1.000000e+00 : f32
    %16 = vector.broadcast %cst_8 : f32 to vector<16x128xf32>
    %17 = arith.addf %16, %15 : vector<16x128xf32>
    %18 = arith.mulf %7, %17 : vector<16x128xf32>
    %19 = arith.truncf %18 : vector<16x128xf32> to vector<16x128xbf16>
    %c0_9 = arith.constant 0 : index
    %c0_10 = arith.constant 0 : index
    %20 = vector.load %arg4[%c0_9, %c0_10] : memref<128x32xbf16, #tpu.memory_space<vmem>>, vector<128x32xbf16>
    %cst_11 = arith.constant dense<0.000000e+00> : vector<16x32xf32>
    %21 = tpu.matmul %19, %20, %cst_11 {dimension_numbers = #tpu.dot_dimension_numbers<[1], [0], [0], [1], [0, 0, 1, 1], [], []>} : vector<16x128xbf16>, vector<128x32xbf16>, vector<16x32xf32> -> vector<16x32xf32>
    %c0_12 = arith.constant 0 : index
    %c0_13 = arith.constant 0 : index
    %22 = vector.load %arg5[%c0_12, %c0_13] : memref<1x32xf32, #tpu.memory_space<vmem>>, vector<1x32xf32>
    %23 = vector.broadcast %22 : vector<1x32xf32> to vector<16x32xf32>
    %24 = arith.addf %21, %23 : vector<16x32xf32>
    %c0_14 = arith.constant 0 : index
    %c0_15 = arith.constant 0 : index
    %25 = vector.load %arg6[%c0_14, %c0_15] : memref<16x32xf32, #tpu.memory_space<vmem>>, vector<16x32xf32>
    tpu.vector_store %arg6[%c0_14, %c0_15], %24 {strides = array<i32>} : memref<16x32xf32, #tpu.memory_space<vmem>>, vector<16x32xf32>,
    return
  }
  func.func @transform_0(%arg0: i32) -> (i32, i32) {
    %c0_i32 = arith.constant 0 : i32
    %c0_i32_0 = arith.constant 0 : i32
    return %arg0, %c0_i32 : i32, i32
  }
  func.func @transform_1(%arg0: i32) -> (i32, i32) {
    %c0_i32 = arith.constant 0 : i32
    %c0_i32_0 = arith.constant 0 : i32
    %c0_i32_1 = arith.constant 0 : i32
    return %c0_i32, %c0_i32_0 : i32, i32
  }
  func.func @transform_2(%arg0: i32) -> (i32, i32) {
    %c0_i32 = arith.constant 0 : i32
    %c0_i32_0 = arith.constant 0 : i32
    %c0_i32_1 = arith.constant 0 : i32
    return %c0_i32, %c0_i32_0 : i32, i32
  }
  func.func @transform_3(%arg0: i32) -> (i32, i32) {
    %c0_i32 = arith.constant 0 : i32
    %c0_i32_0 = arith.constant 0 : i32
    %c0_i32_1 = arith.constant 0 : i32
    return %c0_i32, %c0_i32_0 : i32, i32
  }
  func.func @transform_4(%arg0: i32) -> (i32, i32) {
    %c0_i32 = arith.constant 0 : i32
    %c0_i32_0 = arith.constant 0 : i32
    %c0_i32_1 = arith.constant 0 : i32
    return %c0_i32, %c0_i32_0 : i32, i32
  }
  func.func @transform_5(%arg0: i32) -> (i32, i32) {
    %c0_i32 = arith.constant 0 : i32
    %c0_i32_0 = arith.constant 0 : i32
    return %arg0, %c0_i32 : i32, i32
  }
}

</mosaic_0001>

<llo_original>
// kernel: mlp_forward.1
$region0: #{mlp_forward.1}
  #allocation0 [shape = 'u32[]', space=smem, size = 0x4, offset = 0x4, fixed_abs, tag = 'smem constant byte address 0x4 - core index']
  #allocation1 [shape = 'u32[144,128]{1,0:T(1,128)}', space=vmem, size = 0x12000, scoped, tag = 'internal scratch']
  %s0 = inlined_call_operand.vmem [shape: bf16[16,32], index: 0, kind: input, shape index: {}]
  %s1 = inlined_call_operand.vmem [shape: bf16[32,128], index: 1, kind: input, shape index: {}]
  %s2 = inlined_call_operand.vmem [shape: f32[1,128], index: 2, kind: input, shape index: {}]
  %s3 = inlined_call_operand.vmem [shape: bf16[128,32], index: 3, kind: input, shape index: {}]
  %s4 = inlined_call_operand.vmem [shape: f32[1,32], index: 4, kind: input, shape index: {}]
  %s5 = inlined_call_operand.hbm [shape: f32[16,32], index: 5, kind: output, shape index: {}]
  %s6 = sld [smem:[#allocation0]]
  $region30: #{mlp_forward.1} parent=0
    _
  %s8 = ssub.s32 1, %s6
  %s9 = scalar_select 0, %s8, %s6
  $region1: #{mlp_forward.1} parent=0
    #allocation2 [shape = 'u8[8192]{0}', space=vmem, size = 0x2000, scoped, tag = 'output window, operand 0, single buffered']
    #allocation3 [shape = 's32[1]{0}', space=sflag, size = 0x4, scoped, tag = 'scoped memory for mlp_forward.1']
    %10 = vsyncpa [#allocation3], 0
    // Predicated region
    $region2: #{mlp_forward.1} parent=1 // pred_check
      _
    $region3: #{mlp_forward.1} parent=1 // pred_check_branch
      %12 = sbr.rel (0) target = $region5
    $region4: #{mlp_forward.1} parent=1 // pred_region
      _
    $region5: #{mlp_forward.1} parent=1 // pred_fallthru
      _
    // Predicated region
    $region6: #{mlp_forward.1} parent=1 // pred_check
      _
    $region7: #{mlp_forward.1} parent=1 // pred_check_branch
      %14 = sbr.rel (0) target = $region9
    $region8: #{mlp_forward.1} parent=1 // pred_region
      _
    $region9: #{mlp_forward.1} parent=1 // pred_fallthru
      _
    // Predicated region
    $region10: #{mlp_forward.1} parent=1 // pred_check
      _
    $region11: #{mlp_forward.1} parent=1 // pred_check_branch
      %16 = sbr.rel (0) target = $region13
    $region12: #{mlp_forward.1} parent=1 // pred_region
      _
    $region13: #{mlp_forward.1} parent=1 // pred_fallthru
      _
    // Predicated region
    $region14: #{mlp_forward.1} parent=1 // pred_check
      _
    $region15: #{mlp_forward.1} parent=1 // pred_check_branch
      %18 = sbr.rel (0) target = $region17
    $region16: #{mlp_forward.1} parent=1 // pred_region
      _
    $region17: #{mlp_forward.1} parent=1 // pred_fallthru
      _
    // Predicated region
    $region18: #{mlp_forward.1} parent=1 // pred_check
      _
    $region19: #{mlp_forward.1} parent=1 // pred_check_branch
      %20 = sbr.rel (0) target = $region21
    $region20: #{mlp_forward.1} parent=1 // pred_region
      _
    $region21: #{mlp_forward.1} parent=1 // pred_fallthru
      _
    %v22 = vld [vmem:[%s0] sm:$0xf]
    %v23 = vld [vmem:[%s0 + $0x4] sm:$0xf]
    %v24 = vld [vmem:[%s1] sm:$0xf]
    %v25 = vld [vmem:[%s1 + $0x4] sm:$0xf]
    %v26 = vld [vmem:[%s1 + $0x8] sm:$0xf]
    %v27 = vld [vmem:[%s1 + $0xc] sm:$0xf]
    %v28 = vld [vmem:[%s2] sm:$0x1]
    %v30 = vlaneseq
    %v31 = vshrl.u32 %v30, 7
    %v32 = vsub.s32 0, %v31
    %v33 = vrot.slane %v28, %v32
    %v37 = vunpack.c.l.b16 %v22
    %v38 = vunpack.c.l.b16 %v23
    %v39 = vpack.c.b16 %v38, %v37
    %v44 = vunpack.c.l.b16 %v24
    %v45 = vunpack.c.l.b16 %v25
    %v46 = vunpack.c.l.b16 %v26
    %v47 = vunpack.c.l.b16 %v27
    %v48 = vpack.c.b16 %v45, %v44
    %v49 = vpack.c.b16 %v47, %v46
    %vm52 = vcmask 261120
    %v54 = vsel %vm52, %v39, 0
    %56 = vmatprep.subr.bf16.mxu0 0
    %57 = vmatpush1.bf16.msra.mxu0 0
    %58 = vmatprep.subr.bf16.mxu0 0
    %59 = vmatpush1.bf16.msra.mxu0 0
    %60 = vmatprep.subr.bf16.mxu0 0
    %61 = vmatpush1.bf16.msra.mxu0 0
    %62 = vmatprep.subr.bf16.mxu0 0
    %63 = vmatpush1.bf16.msra.mxu0 0
    %64 = vmatprep.subr.bf16.mxu0 0
    %65 = vmatpush1.bf16.msra.mxu0 0
    %66 = vmatprep.subr.bf16.mxu0 0
    %67 = vmatpush1.bf16.msra.mxu0 0
    %68 = vmatprep.subr.bf16.mxu0 0
    %69 = vmatpush1.bf16.msra.mxu0 %v49
    %70 = vmatprep.subr.bf16.mxu0 0
    %71 = vmatpush1.bf16.msra.mxu0 %v48
    %72 = vmatprep.subr.bf16.mxu0 0
    %73 = vmatpush2.bf16.msra.mxu0 0
    %74 = vmatprep.subr.bf16.mxu0 0
    %75 = vmatpush2.bf16.msra.mxu0 0
    %76 = vmatprep.subr.bf16.mxu0 0
    %77 = vmatpush2.bf16.msra.mxu0 0
    %78 = vmatprep.subr.bf16.mxu0 0
    %79 = vmatpush2.bf16.msra.mxu0 0
    %80 = vmatprep.subr.bf16.mxu0 0
    %81 = vmatpush2.bf16.msra.mxu0 0
    %82 = vmatprep.subr.bf16.mxu0 0
    %83 = vmatpush2.bf16.msra.mxu0 0
    %84 = vmatprep.subr.bf16.mxu0 0
    %85 = vmatpush2.bf16.msra.mxu0 0
    %86 = vmatprep.subr.bf16.mxu0 0
    %87 = vmatpush2.bf16.msra.mxu0 0
    %88 = vmatprep.mubr.bf16.mxu0 0
    %89 = vmatmul.mubr.bf16.gmra.mxu0 %v54
    %v90 = vpop.f32.mrf.mxu0
    %v91 = vadd.f32 %v33, %v90
    %v92 = vpop.f32.mrf.mxu0
    %v93 = vpop.f32.mrf.mxu0
    %v94 = vadd.f32 %v33, %v93
    %v95 = vpop.f32.mrf.mxu0
    %96 = vdwg.mxu0
    %v97 = vmul.f32 %v91, 0.5
    %v98 = vmul.f32 %v94, 0.5
    %v99 = vmul.f32 %v91, %v91
    %v100 = vmul.f32 %v94, %v94
    %v101 = vmul.f32 %v99, %v91
    %v102 = vmul.f32 %v100, %v94
    %v103 = vmul.f32 %v101, 0.044715
    %v104 = vmul.f32 %v102, 0.044715
    %v105 = vadd.f32 %v91, %v103
    %v106 = vadd.f32 %v94, %v104
    %v107 = vmul.f32 %v105, 0.7978846
    %v108 = vmul.f32 %v106, 0.7978846
    %v109 = vtanh.pop %v107
    %v110 = vtanh.pop %v108
    %v111 = vadd.f32 %v109, 1.0
    %v112 = vadd.f32 %v110, 1.0
    %v113 = vmul.f32 %v97, %v111
    %v114 = vmul.f32 %v98, %v112
    %v115 = vpack.c.bf16 %v114, %v113
    %v116 = vld [vmem:[%s3] sm:$0xf]
    %v117 = vld [vmem:[%s3 + $0x4] sm:$0xf]
    %v118 = vld [vmem:[%s3 + $0x8] sm:$0xf]
    %v119 = vld [vmem:[%s3 + $0xc] sm:$0xf]
    %v120 = vld [vmem:[%s3 + $0x10] sm:$0xf]
    %v121 = vld [vmem:[%s3 + $0x14] sm:$0xf]
    %v122 = vld [vmem:[%s3 + $0x18] sm:$0xf]
    %v123 = vld [vmem:[%s3 + $0x1c] sm:$0xf]
    %v124 = vld [vmem:[%s3 + $0x20] sm:$0xf]
    %v125 = vld [vmem:[%s3 + $0x24] sm:$0xf]
    %v126 = vld [vmem:[%s3 + $0x28] sm:$0xf]
    %v127 = vld [vmem:[%s3 + $0x2c] sm:$0xf]
    %v128 = vld [vmem:[%s3 + $0x30] sm:$0xf]
    %v129 = vld [vmem:[%s3 + $0x34] sm:$0xf]
    %v130 = vld [vmem:[%s3 + $0x38] sm:$0xf]
    %v131 = vld [vmem:[%s3 + $0x3c] sm:$0xf]
    %v132 = vld [vmem:[%s4] sm:$0x1]
    %v134 = vlaneseq
    %v135 = vshrl.u32 %v134, 7
    %v136 = vsub.s32 0, %v135
    %v137 = vrot.slane %v132, %v136
    %v155 = vunpack.c.l.b16 %v116
    %v156 = vunpack.c.l.b16 %v117
    %v157 = vunpack.c.l.b16 %v118
    %v158 = vunpack.c.l.b16 %v119
    %v159 = vunpack.c.l.b16 %v120
    %v160 = vunpack.c.l.b16 %v121
    %v161 = vunpack.c.l.b16 %v122
    %v162 = vunpack.c.l.b16 %v123
    %v163 = vunpack.c.l.b16 %v124
    %v164 = vunpack.c.l.b16 %v125
    %v165 = vunpack.c.l.b16 %v126
    %v166 = vunpack.c.l.b16 %v127
    %v167 = vunpack.c.l.b16 %v128
    %v168 = vunpack.c.l.b16 %v129
    %v169 = vunpack.c.l.b16 %v130
    %v170 = vunpack.c.l.b16 %v131
    %v171 = vpack.c.b16 %v156, %v155
    %v172 = vpack.c.b16 %v158, %v157
    %v173 = vpack.c.b16 %v160, %v159
    %v174 = vpack.c.b16 %v162, %v161
    %v175 = vpack.c.b16 %v164, %v163
    %v176 = vpack.c.b16 %v166, %v165
    %v177 = vpack.c.b16 %v168, %v167
    %v178 = vpack.c.b16 %v170, %v169
    %187 = vmatprep.subr.bf16.mxu0 0
    %188 = vmatpush1.bf16.msra.mxu0 %v178
    %189 = vmatprep.subr.bf16.mxu0 0
    %190 = vmatpush1.bf16.msra.mxu0 %v177
    %191 = vmatprep.subr.bf16.mxu0 0
    %192 = vmatpush1.bf16.msra.mxu0 %v176
    %193 = vmatprep.subr.bf16.mxu0 0
    %194 = vmatpush1.bf16.msra.mxu0 %v175
    %195 = vmatprep.subr.bf16.mxu0 0
    %196 = vmatpush1.bf16.msra.mxu0 %v174
    %197 = vmatprep.subr.bf16.mxu0 0
    %198 = vmatpush1.bf16.msra.mxu0 %v173
    %199 = vmatprep.subr.bf16.mxu0 0
    %200 = vmatpush1.bf16.msra.mxu0 %v172
    %201 = vmatprep.subr.bf16.mxu0 0
    %202 = vmatpush1.bf16.msra.mxu0 %v171
    %203 = vmatprep.subr.bf16.mxu0 0
    %204 = vmatpush2.bf16.msra.mxu0 0
    %205 = vmatprep.subr.bf16.mxu0 0
    %206 = vmatpush2.bf16.msra.mxu0 0
    %207 = vmatprep.subr.bf16.mxu0 0
    %208 = vmatpush2.bf16.msra.mxu0 0
    %209 = vmatprep.subr.bf16.mxu0 0
    %210 = vmatpush2.bf16.msra.mxu0 0
    %211 = vmatprep.subr.bf16.mxu0 0
    %212 = vmatpush2.bf16.msra.mxu0 0
    %213 = vmatprep.subr.bf16.mxu0 0
    %214 = vmatpush2.bf16.msra.mxu0 0
    %215 = vmatprep.subr.bf16.mxu0 0
    %216 = vmatpush2.bf16.msra.mxu0 0
    %217 = vmatprep.subr.bf16.mxu0 0
    %218 = vmatpush2.bf16.msra.mxu0 0
    %219 = vmatprep.mubr.bf16.mxu0 0
    %220 = vmatmul.mubr.bf16.gmra.mxu0 %v115
    %v221 = vpop.f32.mrf.mxu0
    %v222 = vadd.f32 %v137, %v221
    %v223 = vpop.f32.mrf.mxu0
    %v224 = vpop.f32.mrf.mxu0
    %v225 = vadd.f32 %v137, %v224
    %v226 = vpop.f32.mrf.mxu0
    %227 = vdwg.mxu0
    %228 = vst.msk [vmem:[#allocation2] sm:$0xff] %vm52, %v222
    %229 = vst.msk [vmem:[#allocation2 + $0x8] sm:$0xff] %vm52, %v225
    // Predicated region
    $region22: #{mlp_forward.1} parent=1 // pred_check
      _
    $region23: #{mlp_forward.1} parent=1 // pred_check_branch
      %231 = sbr.rel (0) target = $region25
    $region24: #{mlp_forward.1} parent=1 // pred_region
      %s233 = ssub.s32 256, 256
      %234 = vsyncadd [#allocation3], %s233
      %s235 = sshll.u32 [#allocation2], 4
      %s236 = int_to_ptr.vmem [resolvable:$true] %s235
      %241 = dma.vmem_to_hbm [thread:$0]  %s236, 256, %s5, [#allocation3], 128, 128, 8
    $region25: #{mlp_forward.1} parent=1 // pred_fallthru
      _
    // Predicated region
    $region26: #{mlp_forward.1} parent=1 // pred_check
      _
    $region27: #{mlp_forward.1} parent=1 // pred_check_branch
      %243 = sbr.rel (0) target = $region29
    $region28: #{mlp_forward.1} parent=1 // pred_region
      %244 = dma.done [#allocation3], 256
    $region29: #{mlp_forward.1} parent=1 // pred_fallthru
      _
    %245 = vsyncpa [#allocation3], 1

</llo_original>
